<compile_context>
chip_gen: v6e
topology: v6e:2x2x1
jax: 0.10.0
libtpu: 0.0.40
codegen_flags: <defaults>
</compile_context>

<pallas_src>
import jax
import jax.numpy as jnp
from jax import lax
from jax.experimental import pallas as pl
from jax.experimental.pallas import tpu as pltpu

LANE = 128
SUBLANE = 8


def _round_up(x, m):
    return (x + m - 1) // m * m


def _cdiv(a, b):
    return -(-a // b)


def qnetwork_kernel(x_ref, w1_ref, b1_ref, w2_ref, b2_ref, w3t_ref, b3t_ref, o_ref):
    """One batch tile.  bf16 MXU operands, f32 accumulation, transposed logit store."""
    # x arrives in f32; cast to bf16 in-kernel (free VPU work, no wrapper-side pass).
    x = x_ref[...].astype(jnp.bfloat16)                                   # (TB, n_states)

    # Layer 1: Linear + ReLU  (f32 accumulate, bf16 re-cast for the next MXU pass).
    h1 = jnp.dot(x, w1_ref[...], preferred_element_type=jnp.float32) + b1_ref[...]
    h1 = jnp.maximum(h1, 0.0).astype(jnp.bfloat16)                        # (TB, hidden)

    # Layer 2: Linear + ReLU.
    h2 = jnp.dot(h1, w2_ref[...], preferred_element_type=jnp.float32) + b2_ref[...]
    h2 = jnp.maximum(h2, 0.0).astype(jnp.bfloat16)                        # (TB, hidden)

    # Layer 3: Linear, computed *transposed*: out_t[a, m] = sum_h w3t[a, h] * h2[m, h].
    # Contracting the last dims of both operands is MXU-native, so no transpose op is
    # emitted, and the (n_out_p8, TB) store is lane-dense with ~16x fewer writeback
    # bytes than a 128-lane-padded (TB, 128) f32 output.
    out_t = lax.dot_general(
        w3t_ref[...], h2,
        dimension_numbers=(((1,), (1,)), ((), ())),
        preferred_element_type=jnp.float32,
    ) + b3t_ref[...]                                                      # (n_out_p8, TB)
    o_ref[...] = out_t.astype(o_ref.dtype)


def qnetwork_forward(x, params, *, block_batch=512):
    """Batch-tiled Pallas call.  Weights stay VMEM-resident across grid steps."""
    w1, b1, w2, b2, w3, b3 = params
    batch, n_states = x.shape
    hidden = w1.shape[1]
    n_actions = w3.shape[1]

    # Final layer stored pre-transposed: (n_actions rounded up to 8 sublanes, hidden).
    n_out_p8 = _round_up(n_actions, SUBLANE)
    w3t = jnp.zeros((n_out_p8, hidden), w3.dtype).at[:n_actions, :].set(w3.T)
    b3t = jnp.zeros((n_out_p8, 1), b3.dtype).at[:n_actions, :].set(b3.T)

    # Batch tile: multiple of 128 (it is the lane axis of the transposed output), as
    # large as practical so the ~0.35us/grid-step overhead amortizes.
    tb = min(_round_up(block_batch, LANE), _round_up(batch, LANE))
    n_tiles = _cdiv(batch, tb)
    # v7x megacore balance: avoid an odd number (>1) of "parallel" tiles so the two
    # TensorCores get the same amount of work.  Harmless on single-TC v5e/v6e.
    if n_tiles > 1 and n_tiles % 2 == 1:
        n_tiles += 1
        tb = _round_up(_cdiv(batch, n_tiles), LANE)
    batch_p = n_tiles * tb
    if batch_p != batch:
        # Single padding pass over f32 x; the bf16 cast happens inside the kernel.
        x = jnp.pad(x, ((0, batch_p - batch), (0, 0)))
    x = x.astype(jnp.float32)

    # bf16 MXU operands for the weights (tiny one-time casts), f32 biases.
    w1_bf = w1.astype(jnp.bfloat16)
    w2_bf = w2.astype(jnp.bfloat16)
    w3t_bf = w3t.astype(jnp.bfloat16)
    b1_f = b1.astype(jnp.float32)
    b2_f = b2.astype(jnp.float32)
    b3t_f = b3t.astype(jnp.float32)

    grid = (n_tiles,)

    # Full-array blocks with a constant block index: DMA'd once, resident in VMEM
    # across all grid steps (default buffering accepted: weights here are only ~KBs).
    resident = lambda a: pl.BlockSpec(a.shape, lambda i: (0, 0))

    flops = 2 * batch_p * (n_states * hidden + hidden * hidden + hidden * n_out_p8)
    bytes_accessed = (
        batch_p * n_states * 4                                    # x in (f32)
        + (w1_bf.size + w2_bf.size + w3t_bf.size) * 2             # bf16 weights
        + (b1_f.size + b2_f.size + b3t_f.size) * 4                # f32 biases
        + n_out_p8 * batch_p * 4                                  # transposed f32 logits out
    )

    # Explicit scoped-VMEM budget: large batch tiles must still compile on v5e's
    # 16 MiB default (v6e/v7x default to 32 MiB).
    vmem_bytes = (
        2 * tb * n_states * 4                                     # x blocks (double-buffered)
        + 2 * n_out_p8 * tb * 4                                   # out blocks (double-buffered)
        + 2 * (w1_bf.size + w2_bf.size + w3t_bf.size) * 2
        + 2 * (b1_f.size + b2_f.size + b3t_f.size) * 4
    )
    vmem_limit = int(min(max(2 * vmem_bytes, 32 * 1024 * 1024), 100 * 1024 * 1024))

    out_t = pl.pallas_call(
        qnetwork_kernel,
        out_shape=jax.ShapeDtypeStruct((n_out_p8, batch_p), jnp.float32),
        grid=grid,
        in_specs=[
            pl.BlockSpec((tb, n_states), lambda i: (i, 0)),       # x: tiled over batch
            resident(w1_bf), resident(b1_f),
            resident(w2_bf), resident(b2_f),
            resident(w3t_bf), resident(b3t_f),
        ],
        out_specs=pl.BlockSpec((n_out_p8, tb), lambda i: (0, i)),
        compiler_params=pltpu.CompilerParams(
            dimension_semantics=("parallel",),                    # shards batch tiles across TCs
            vmem_limit_bytes=vmem_limit,
        ),
        cost_estimate=pl.CostEstimate(
            flops=flops, transcendentals=0, bytes_accessed=bytes_accessed
        ),
    )(x, w1_bf, b1_f, w2_bf, b2_f, w3t_bf, b3t_f)

    # (n_out_p8, batch_p) -> (batch, n_actions): tiny slice + transpose outside the kernel.
    return out_t[:n_actions, :batch].T


def init_qnetwork_params(key, n_states, n_actions, hidden_dim):
    """Deterministic init mimicking torch.nn.Linear defaults:
    weights/bias ~ U(-1/sqrt(fan_in), 1/sqrt(fan_in)).
    Weights stored as [in_features, out_features] (transposed vs torch)."""
    keys = jax.random.split(key, 6)

    def linear(kw, kb, fan_in, fan_out):
        bound = 1.0 / jnp.sqrt(jnp.float32(fan_in))
        w = jax.random.uniform(kw, (fan_in, fan_out), jnp.float32, -bound, bound)
        b = jax.random.uniform(kb, (1, fan_out), jnp.float32, -bound, bound)
        return w, b

    w1, b1 = linear(keys[0], keys[1], n_states, hidden_dim)
    w2, b2 = linear(keys[2], keys[3], hidden_dim, hidden_dim)
    w3, b3 = linear(keys[4], keys[5], hidden_dim, n_actions)
    return (w1, b1, w2, b2, w3, b3)


def qnetwork_reference(x, params):
    """Pure-JAX f32 reference for correctness check."""
    w1, b1, w2, b2, w3, b3 = params
    h1 = jnp.maximum(x @ w1 + b1, 0.0)
    h2 = jnp.maximum(h1 @ w2 + b2, 0.0)
    return h2 @ w3 + b3


if __name__ == "__main__":
    # At this toy problem size the call is launch/DMA-overhead dominated; the kernel is
    # written to amortize that over large replay-buffer batches.
    n_states, n_actions, hidden_dim = 16, 8, 32
    batch = 300  # deliberately not a multiple of 128: exercises the padding path

    key = jax.random.PRNGKey(0)
    k_params, k_x = jax.random.split(key)

    params = init_qnetwork_params(k_params, n_states, n_actions, hidden_dim)
    # "board state" input: values in {0, 1, 2} (exactly representable in bf16)
    x = jax.random.randint(k_x, (batch, n_states), 0, 3).astype(jnp.float32)

    ref = qnetwork_reference(x, params)

    # (a) default large tile: single 384-row batch tile.
    out = jax.block_until_ready(qnetwork_forward(x, params))
    assert out.shape == (batch, n_actions)
    # bf16 operands with f32 accumulation: loosened tolerance vs the f32 reference.
    assert jnp.allclose(out, ref, atol=7e-2, rtol=5e-2), "mismatch vs reference (large tile)"

    # (b) small tile: multi-step grid (3 natural tiles -> 4 for an even megacore split).
    out_small = jax.block_until_ready(qnetwork_forward(x, params, block_batch=128))
    assert out_small.shape == (batch, n_actions)
    assert jnp.allclose(out_small, ref, atol=7e-2, rtol=5e-2), "mismatch vs reference (small tile)"

    print("KERNEL_OK")
</pallas_src>

<mosaic_0001>
module attributes {stable_mosaic.version = 11 : i64} {
  func.func @qnetwork_kernel(%arg0: i32, %arg1: memref<384x16xf32, #tpu.memory_space<vmem>>, %arg2: memref<16x32xbf16, #tpu.memory_space<vmem>>, %arg3: memref<1x32xf32, #tpu.memory_space<vmem>>, %arg4: memref<32x32xbf16, #tpu.memory_space<vmem>>, %arg5: memref<1x32xf32, #tpu.memory_space<vmem>>, %arg6: memref<8x32xbf16, #tpu.memory_space<vmem>>, %arg7: memref<8x1xf32, #tpu.memory_space<vmem>>, %arg8: memref<8x384xf32, #tpu.memory_space<vmem>>) attributes {dimension_semantics = [#tpu.dimension_semantics<parallel>], iteration_bounds = array<i64: 1>, scalar_prefetch = 0 : i64, scratch_operands = 0 : i64, tpu.core_type = #tpu.core_type<tc>, window_params = [{transform_indices = @transform_0, window_bounds = array<i64: 384, 16>}, {pipeline_mode = #tpu.pipeline_mode<synchronous>, transform_indices = @transform_1, window_bounds = array<i64: 16, 32>}, {pipeline_mode = #tpu.pipeline_mode<synchronous>, transform_indices = @transform_2, window_bounds = array<i64: 1, 32>}, {pipeline_mode = #tpu.pipeline_mode<synchronous>, transform_indices = @transform_3, window_bounds = array<i64: 32, 32>}, {pipeline_mode = #tpu.pipeline_mode<synchronous>, transform_indices = @transform_4, window_bounds = array<i64: 1, 32>}, {pipeline_mode = #tpu.pipeline_mode<synchronous>, transform_indices = @transform_5, window_bounds = array<i64: 8, 32>}, {pipeline_mode = #tpu.pipeline_mode<synchronous>, transform_indices = @transform_6, window_bounds = array<i64: 8, 1>}, {transform_indices = @transform_7, window_bounds = array<i64: 8, 384>}]} {
    %c0 = arith.constant 0 : index
    %c0_0 = arith.constant 0 : index
    %0 = vector.load %arg1[%c0, %c0_0] : memref<384x16xf32, #tpu.memory_space<vmem>>, vector<384x16xf32>
    %1 = arith.truncf %0 : vector<384x16xf32> to vector<384x16xbf16>
    %c0_1 = arith.constant 0 : index
    %c0_2 = arith.constant 0 : index
    %2 = vector.load %arg2[%c0_1, %c0_2] : memref<16x32xbf16, #tpu.memory_space<vmem>>, vector<16x32xbf16>
    %cst = arith.constant dense<0.000000e+00> : vector<384x32xf32>
    %3 = tpu.matmul %1, %2, %cst {dimension_numbers = #tpu.dot_dimension_numbers<[1], [0], [0], [1], [0, 0, 1, 1], [], []>} : vector<384x16xbf16>, vector<16x32xbf16>, vector<384x32xf32> -> vector<384x32xf32>
    %c0_3 = arith.constant 0 : index
    %c0_4 = arith.constant 0 : index
    %4 = vector.load %arg3[%c0_3, %c0_4] : memref<1x32xf32, #tpu.memory_space<vmem>>, vector<1x32xf32>
    %5 = vector.broadcast %4 : vector<1x32xf32> to vector<384x32xf32>
    %6 = arith.addf %3, %5 : vector<384x32xf32>
    %cst_5 = arith.constant 0.000000e+00 : f32
    %7 = vector.broadcast %cst_5 : f32 to vector<384x32xf32>
    %8 = arith.maximumf %6, %7 : vector<384x32xf32>
    %9 = arith.truncf %8 : vector<384x32xf32> to vector<384x32xbf16>
    %c0_6 = arith.constant 0 : index
    %c0_7 = arith.constant 0 : index
    %10 = vector.load %arg4[%c0_6, %c0_7] : memref<32x32xbf16, #tpu.memory_space<vmem>>, vector<32x32xbf16>
    %cst_8 = arith.constant dense<0.000000e+00> : vector<384x32xf32>
    %11 = tpu.matmul %9, %10, %cst_8 {dimension_numbers = #tpu.dot_dimension_numbers<[1], [0], [0], [1], [0, 0, 1, 1], [], []>} : vector<384x32xbf16>, vector<32x32xbf16>, vector<384x32xf32> -> vector<384x32xf32>
    %c0_9 = arith.constant 0 : index
    %c0_10 = arith.constant 0 : index
    %12 = vector.load %arg5[%c0_9, %c0_10] : memref<1x32xf32, #tpu.memory_space<vmem>>, vector<1x32xf32>
    %13 = vector.broadcast %12 : vector<1x32xf32> to vector<384x32xf32>
    %14 = arith.addf %11, %13 : vector<384x32xf32>
    %cst_11 = arith.constant 0.000000e+00 : f32
    %15 = vector.broadcast %cst_11 : f32 to vector<384x32xf32>
    %16 = arith.maximumf %14, %15 : vector<384x32xf32>
    %17 = arith.truncf %16 : vector<384x32xf32> to vector<384x32xbf16>
    %c0_12 = arith.constant 0 : index
    %c0_13 = arith.constant 0 : index
    %18 = vector.load %arg6[%c0_12, %c0_13] : memref<8x32xbf16, #tpu.memory_space<vmem>>, vector<8x32xbf16>
    %cst_14 = arith.constant dense<0.000000e+00> : vector<8x384xf32>
    %19 = tpu.matmul %18, %17, %cst_14 {dimension_numbers = #tpu.dot_dimension_numbers<[1], [1], [0], [0], [0, 0, 1, 0], [], []>} : vector<8x32xbf16>, vector<384x32xbf16>, vector<8x384xf32> -> vector<8x384xf32>
    %c0_15 = arith.constant 0 : index
    %c0_16 = arith.constant 0 : index
    %20 = vector.load %arg7[%c0_15, %c0_16] : memref<8x1xf32, #tpu.memory_space<vmem>>, vector<8x1xf32>
    %21 = vector.broadcast %20 : vector<8x1xf32> to vector<8x384xf32>
    %22 = arith.addf %19, %21 : vector<8x384xf32>
    %c0_17 = arith.constant 0 : index
    %c0_18 = arith.constant 0 : index
    %23 = vector.load %arg8[%c0_17, %c0_18] : memref<8x384xf32, #tpu.memory_space<vmem>>, vector<8x384xf32>
    tpu.vector_store %arg8[%c0_17, %c0_18], %22 {strides = array<i32>} : memref<8x384xf32, #tpu.memory_space<vmem>>, vector<8x384xf32>,
    return
  }
  func.func @transform_0(%arg0: i32) -> (i32, i32) {
    %c0_i32 = arith.constant 0 : i32
    %c0_i32_0 = arith.constant 0 : i32
    return %arg0, %c0_i32 : i32, i32
  }
  func.func @transform_1(%arg0: i32) -> (i32, i32) {
    %c0_i32 = arith.constant 0 : i32
    %c0_i32_0 = arith.constant 0 : i32
    %c0_i32_1 = arith.constant 0 : i32
    return %c0_i32, %c0_i32_0 : i32, i32
  }
  func.func @transform_2(%arg0: i32) -> (i32, i32) {
    %c0_i32 = arith.constant 0 : i32
    %c0_i32_0 = arith.constant 0 : i32
    %c0_i32_1 = arith.constant 0 : i32
    return %c0_i32, %c0_i32_0 : i32, i32
  }
  func.func @transform_3(%arg0: i32) -> (i32, i32) {
    %c0_i32 = arith.constant 0 : i32
    %c0_i32_0 = arith.constant 0 : i32
    %c0_i32_1 = arith.constant 0 : i32
    return %c0_i32, %c0_i32_0 : i32, i32
  }
  func.func @transform_4(%arg0: i32) -> (i32, i32) {
    %c0_i32 = arith.constant 0 : i32
    %c0_i32_0 = arith.constant 0 : i32
    %c0_i32_1 = arith.constant 0 : i32
    return %c0_i32, %c0_i32_0 : i32, i32
  }
  func.func @transform_5(%arg0: i32) -> (i32, i32) {
    %c0_i32 = arith.constant 0 : i32
    %c0_i32_0 = arith.constant 0 : i32
    %c0_i32_1 = arith.constant 0 : i32
    return %c0_i32, %c0_i32_0 : i32, i32
  }
  func.func @transform_6(%arg0: i32) -> (i32, i32) {
    %c0_i32 = arith.constant 0 : i32
    %c0_i32_0 = arith.constant 0 : i32
    %c0_i32_1 = arith.constant 0 : i32
    return %c0_i32, %c0_i32_0 : i32, i32
  }
  func.func @transform_7(%arg0: i32) -> (i32, i32) {
    %c0_i32 = arith.constant 0 : i32
    %c0_i32_0 = arith.constant 0 : i32
    return %c0_i32, %arg0 : i32, i32
  }
}

</mosaic_0001>

<llo_original>
// kernel: tpu_custom_call.1
$region0: #{tpu_custom_call.1}
  #allocation0 [shape = 'u32[]', space=smem, size = 0x4, offset = 0x4, fixed_abs, tag = 'smem constant byte address 0x4 - core index']
  #allocation1 [shape = 'u32[144,128]{1,0:T(1,128)}', space=vmem, size = 0x12000, scoped, tag = 'internal scratch']
  %s0 = inlined_call_operand.vmem [shape: f32[384,16], index: 0, kind: input, shape index: {}]
  %s1 = inlined_call_operand.vmem [shape: bf16[16,32], index: 1, kind: input, shape index: {}]
  %s2 = inlined_call_operand.vmem [shape: f32[1,32], index: 2, kind: input, shape index: {}]
  %s3 = inlined_call_operand.vmem [shape: bf16[32,32], index: 3, kind: input, shape index: {}]
  %s4 = inlined_call_operand.vmem [shape: f32[1,32], index: 4, kind: input, shape index: {}]
  %s5 = inlined_call_operand.vmem [shape: bf16[8,32], index: 5, kind: input, shape index: {}]
  %s6 = inlined_call_operand.vmem [shape: f32[8,1], index: 6, kind: input, shape index: {}]
  %s7 = inlined_call_operand.hbm [shape: f32[8,384], index: 7, kind: output, shape index: {}]
  %s8 = sld [smem:[#allocation0]]
  $region38: #{tpu_custom_call.1} parent=0
    _
  %s10 = ssub.s32 1, %s8
  %s11 = scalar_select 0, %s10, %s8
  $region1: #{tpu_custom_call.1} parent=0
    #allocation2 [shape = 'u8[12288]{0}', space=vmem, size = 0x3000, scoped, tag = 'output window, operand 0, single buffered']
    #allocation3 [shape = 's32[1]{0}', space=sflag, size = 0x4, scoped, tag = 'scoped memory for tpu_custom_call.1']
    %12 = vsyncpa [#allocation3], 0
    // Predicated region
    $region2: #{tpu_custom_call.1} parent=1 // pred_check
      _
    $region3: #{tpu_custom_call.1} parent=1 // pred_check_branch
      %14 = sbr.rel (0) target = $region5
    $region4: #{tpu_custom_call.1} parent=1 // pred_region
      _
    $region5: #{tpu_custom_call.1} parent=1 // pred_fallthru
      _
    // Predicated region
    $region6: #{tpu_custom_call.1} parent=1 // pred_check
      _
    $region7: #{tpu_custom_call.1} parent=1 // pred_check_branch
      %16 = sbr.rel (0) target = $region9
    $region8: #{tpu_custom_call.1} parent=1 // pred_region
      _
    $region9: #{tpu_custom_call.1} parent=1 // pred_fallthru
      _
    // Predicated region
    $region10: #{tpu_custom_call.1} parent=1 // pred_check
      _
    $region11: #{tpu_custom_call.1} parent=1 // pred_check_branch
      %18 = sbr.rel (0) target = $region13
    $region12: #{tpu_custom_call.1} parent=1 // pred_region
      _
    $region13: #{tpu_custom_call.1} parent=1 // pred_fallthru
      _
    // Predicated region
    $region14: #{tpu_custom_call.1} parent=1 // pred_check
      _
    $region15: #{tpu_custom_call.1} parent=1 // pred_check_branch
      %20 = sbr.rel (0) target = $region17
    $region16: #{tpu_custom_call.1} parent=1 // pred_region
      _
    $region17: #{tpu_custom_call.1} parent=1 // pred_fallthru
      _
    // Predicated region
    $region18: #{tpu_custom_call.1} parent=1 // pred_check
      _
    $region19: #{tpu_custom_call.1} parent=1 // pred_check_branch
      %22 = sbr.rel (0) target = $region21
    $region20: #{tpu_custom_call.1} parent=1 // pred_region
      _
    $region21: #{tpu_custom_call.1} parent=1 // pred_fallthru
      _
    // Predicated region
    $region22: #{tpu_custom_call.1} parent=1 // pred_check
      _
    $region23: #{tpu_custom_call.1} parent=1 // pred_check_branch
      %24 = sbr.rel (0) target = $region25
    $region24: #{tpu_custom_call.1} parent=1 // pred_region
      _
    $region25: #{tpu_custom_call.1} parent=1 // pred_fallthru
      _
    // Predicated region
    $region26: #{tpu_custom_call.1} parent=1 // pred_check
      _
    $region27: #{tpu_custom_call.1} parent=1 // pred_check_branch
      %26 = sbr.rel (0) target = $region29
    $region28: #{tpu_custom_call.1} parent=1 // pred_region
      _
    $region29: #{tpu_custom_call.1} parent=1 // pred_fallthru
      _
    %v28 = vld [vmem:[%s0] sm:$0xff]
    %v29 = vld [vmem:[%s0 + $0x8] sm:$0xff]
    %v30 = vld [vmem:[%s0 + $0x10] sm:$0xff]
    %v31 = vld [vmem:[%s0 + $0x18] sm:$0xff]
    %v32 = vld [vmem:[%s0 + $0x20] sm:$0xff]
    %v33 = vld [vmem:[%s0 + $0x28] sm:$0xff]
    %v34 = vld [vmem:[%s0 + $0x30] sm:$0xff]
    %v35 = vld [vmem:[%s0 + $0x38] sm:$0xff]
    %v36 = vld [vmem:[%s0 + $0x40] sm:$0xff]
    %v37 = vld [vmem:[%s0 + $0x48] sm:$0xff]
    %v38 = vld [vmem:[%s0 + $0x50] sm:$0xff]
    %v39 = vld [vmem:[%s0 + $0x58] sm:$0xff]
    %v40 = vld [vmem:[%s0 + $0x60] sm:$0xff]
    %v41 = vld [vmem:[%s0 + $0x68] sm:$0xff]
    %v42 = vld [vmem:[%s0 + $0x70] sm:$0xff]
    %v43 = vld [vmem:[%s0 + $0x78] sm:$0xff]
    %v44 = vld [vmem:[%s0 + $0x80] sm:$0xff]
    %v45 = vld [vmem:[%s0 + $0x88] sm:$0xff]
    %v46 = vld [vmem:[%s0 + $0x90] sm:$0xff]
    %v47 = vld [vmem:[%s0 + $0x98] sm:$0xff]
    %v48 = vld [vmem:[%s0 + $0xa0] sm:$0xff]
    %v49 = vld [vmem:[%s0 + $0xa8] sm:$0xff]
    %v50 = vld [vmem:[%s0 + $0xb0] sm:$0xff]
    %v51 = vld [vmem:[%s0 + $0xb8] sm:$0xff]
    %v52 = vld [vmem:[%s0 + $0xc0] sm:$0xff]
    %v53 = vld [vmem:[%s0 + $0xc8] sm:$0xff]
    %v54 = vld [vmem:[%s0 + $0xd0] sm:$0xff]
    %v55 = vld [vmem:[%s0 + $0xd8] sm:$0xff]
    %v56 = vld [vmem:[%s0 + $0xe0] sm:$0xff]
    %v57 = vld [vmem:[%s0 + $0xe8] sm:$0xff]
    %v58 = vld [vmem:[%s0 + $0xf0] sm:$0xff]
    %v59 = vld [vmem:[%s0 + $0xf8] sm:$0xff]
    %v60 = vld [vmem:[%s0 + $0x100] sm:$0xff]
    %v61 = vld [vmem:[%s0 + $0x108] sm:$0xff]
    %v62 = vld [vmem:[%s0 + $0x110] sm:$0xff]
    %v63 = vld [vmem:[%s0 + $0x118] sm:$0xff]
    %v64 = vld [vmem:[%s0 + $0x120] sm:$0xff]
    %v65 = vld [vmem:[%s0 + $0x128] sm:$0xff]
    %v66 = vld [vmem:[%s0 + $0x130] sm:$0xff]
    %v67 = vld [vmem:[%s0 + $0x138] sm:$0xff]
    %v68 = vld [vmem:[%s0 + $0x140] sm:$0xff]
    %v69 = vld [vmem:[%s0 + $0x148] sm:$0xff]
    %v70 = vld [vmem:[%s0 + $0x150] sm:$0xff]
    %v71 = vld [vmem:[%s0 + $0x158] sm:$0xff]
    %v72 = vld [vmem:[%s0 + $0x160] sm:$0xff]
    %v73 = vld [vmem:[%s0 + $0x168] sm:$0xff]
    %v74 = vld [vmem:[%s0 + $0x170] sm:$0xff]
    %v75 = vld [vmem:[%s0 + $0x178] sm:$0xff]
    %v76 = vpack.c.bf16 %v29, %v28
    %v77 = vpack.c.bf16 %v31, %v30
    %v78 = vpack.c.bf16 %v33, %v32
    %v79 = vpack.c.bf16 %v35, %v34
    %v80 = vpack.c.bf16 %v37, %v36
    %v81 = vpack.c.bf16 %v39, %v38
    %v82 = vpack.c.bf16 %v41, %v40
    %v83 = vpack.c.bf16 %v43, %v42
    %v84 = vpack.c.bf16 %v45, %v44
    %v85 = vpack.c.bf16 %v47, %v46
    %v86 = vpack.c.bf16 %v49, %v48
    %v87 = vpack.c.bf16 %v51, %v50
    %v88 = vpack.c.bf16 %v53, %v52
    %v89 = vpack.c.bf16 %v55, %v54
    %v90 = vpack.c.bf16 %v57, %v56
    %v91 = vpack.c.bf16 %v59, %v58
    %v92 = vpack.c.bf16 %v61, %v60
    %v93 = vpack.c.bf16 %v63, %v62
    %v94 = vpack.c.bf16 %v65, %v64
    %v95 = vpack.c.bf16 %v67, %v66
    %v96 = vpack.c.bf16 %v69, %v68
    %v97 = vpack.c.bf16 %v71, %v70
    %v98 = vpack.c.bf16 %v73, %v72
    %v99 = vpack.c.bf16 %v75, %v74
    %v100 = vld [vmem:[%s1] sm:$0xf]
    %v101 = vld [vmem:[%s1 + $0x4] sm:$0xf]
    %v102 = vld [vmem:[%s2] sm:$0x1]
    %v104 = vlaneseq
    %v105 = vshrl.u32 %v104, 7
    %v106 = vsub.s32 0, %v105
    %v107 = vrot.slane %v102, %v106
    %v111 = vunpack.c.l.b16 %v100
    %v112 = vunpack.c.l.b16 %v101
    %v113 = vpack.c.b16 %v112, %v111
    %vm115 = vcmask 130048
    %v117 = vsel %vm115, %v76, 0
    %v120 = vsel %vm115, %v77, 0
    %v123 = vsel %vm115, %v78, 0
    %v126 = vsel %vm115, %v79, 0
    %v129 = vsel %vm115, %v80, 0
    %v132 = vsel %vm115, %v81, 0
    %v135 = vsel %vm115, %v82, 0
    %v138 = vsel %vm115, %v83, 0
    %v141 = vsel %vm115, %v84, 0
    %v144 = vsel %vm115, %v85, 0
    %v147 = vsel %vm115, %v86, 0
    %v150 = vsel %vm115, %v87, 0
    %v153 = vsel %vm115, %v88, 0
    %v156 = vsel %vm115, %v89, 0
    %v159 = vsel %vm115, %v90, 0
    %v162 = vsel %vm115, %v91, 0
    %v165 = vsel %vm115, %v92, 0
    %v168 = vsel %vm115, %v93, 0
    %v171 = vsel %vm115, %v94, 0
    %v174 = vsel %vm115, %v95, 0
    %v177 = vsel %vm115, %v96, 0
    %v180 = vsel %vm115, %v97, 0
    %v183 = vsel %vm115, %v98, 0
    %v186 = vsel %vm115, %v99, 0
    %188 = vmatprep.subr.bf16.mxu0 0
    %189 = vmatpush1.bf16.msra.mxu0 0
    %190 = vmatprep.subr.bf16.mxu0 0
    %191 = vmatpush1.bf16.msra.mxu0 0
    %192 = vmatprep.subr.bf16.mxu0 0
    %193 = vmatpush1.bf16.msra.mxu0 0
    %194 = vmatprep.subr.bf16.mxu0 0
    %195 = vmatpush1.bf16.msra.mxu0 0
    %196 = vmatprep.subr.bf16.mxu0 0
    %197 = vmatpush1.bf16.msra.mxu0 0
    %198 = vmatprep.subr.bf16.mxu0 0
    %199 = vmatpush1.bf16.msra.mxu0 0
    %200 = vmatprep.subr.bf16.mxu0 0
    %201 = vmatpush1.bf16.msra.mxu0 0
    %202 = vmatprep.subr.bf16.mxu0 0
    %203 = vmatpush1.bf16.msra.mxu0 %v113
    %204 = vmatprep.subr.bf16.mxu0 0
    %205 = vmatpush2.bf16.msra.mxu0 0
    %206 = vmatprep.subr.bf16.mxu0 0
    %207 = vmatpush2.bf16.msra.mxu0 0
    %208 = vmatprep.subr.bf16.mxu0 0
    %209 = vmatpush2.bf16.msra.mxu0 0
    %210 = vmatprep.subr.bf16.mxu0 0
    %211 = vmatpush2.bf16.msra.mxu0 0
    %212 = vmatprep.subr.bf16.mxu0 0
    %213 = vmatpush2.bf16.msra.mxu0 0
    %214 = vmatprep.subr.bf16.mxu0 0
    %215 = vmatpush2.bf16.msra.mxu0 0
    %216 = vmatprep.subr.bf16.mxu0 0
    %217 = vmatpush2.bf16.msra.mxu0 0
    %218 = vmatprep.subr.bf16.mxu0 0
    %219 = vmatpush2.bf16.msra.mxu0 0
    %220 = vmatprep.mubr.bf16.mxu0 0
    %221 = vmatmul.mubr.bf16.gmra.mxu0 %v117
    %v222 = vpop.f32.mrf.mxu0
    %v223 = vadd.f32 %v107, %v222
    %v224 = vpop.f32.mrf.mxu0
    %v225 = vpop.f32.mrf.mxu0
    %v226 = vadd.f32 %v107, %v225
    %v227 = vpop.f32.mrf.mxu0
    %228 = vmatprep.mubr.bf16.mxu0 0
    %229 = vmatmul.mubr.bf16.gmra.mxu0 %v120
    %v230 = vpop.f32.mrf.mxu0
    %v231 = vadd.f32 %v107, %v230
    %v232 = vpop.f32.mrf.mxu0
    %v233 = vpop.f32.mrf.mxu0
    %v234 = vadd.f32 %v107, %v233
    %v235 = vpop.f32.mrf.mxu0
    %236 = vmatprep.mubr.bf16.mxu0 0
    %237 = vmatmul.mubr.bf16.gmra.mxu0 %v123
    %v238 = vpop.f32.mrf.mxu0
    %v239 = vadd.f32 %v107, %v238
    %v240 = vpop.f32.mrf.mxu0
    %v241 = vpop.f32.mrf.mxu0
    %v242 = vadd.f32 %v107, %v241
    %v243 = vpop.f32.mrf.mxu0
    %244 = vmatprep.mubr.bf16.mxu0 0
    %245 = vmatmul.mubr.bf16.gmra.mxu0 %v126
    %v246 = vpop.f32.mrf.mxu0
    %v247 = vadd.f32 %v107, %v246
    %v248 = vpop.f32.mrf.mxu0
    %v249 = vpop.f32.mrf.mxu0
    %v250 = vadd.f32 %v107, %v249
    %v251 = vpop.f32.mrf.mxu0
    %252 = vmatprep.mubr.bf16.mxu0 0
    %253 = vmatmul.mubr.bf16.gmra.mxu0 %v129
    %v254 = vpop.f32.mrf.mxu0
    %v255 = vadd.f32 %v107, %v254
    %v256 = vpop.f32.mrf.mxu0
    %v257 = vpop.f32.mrf.mxu0
    %v258 = vadd.f32 %v107, %v257
    %v259 = vpop.f32.mrf.mxu0
    %260 = vmatprep.mubr.bf16.mxu0 0
    %261 = vmatmul.mubr.bf16.gmra.mxu0 %v132
    %v262 = vpop.f32.mrf.mxu0
    %v263 = vadd.f32 %v107, %v262
    %v264 = vpop.f32.mrf.mxu0
    %v265 = vpop.f32.mrf.mxu0
    %v266 = vadd.f32 %v107, %v265
    %v267 = vpop.f32.mrf.mxu0
    %268 = vmatprep.mubr.bf16.mxu0 0
    %269 = vmatmul.mubr.bf16.gmra.mxu0 %v135
    %v270 = vpop.f32.mrf.mxu0
    %v271 = vadd.f32 %v107, %v270
    %v272 = vpop.f32.mrf.mxu0
    %v273 = vpop.f32.mrf.mxu0
    %v274 = vadd.f32 %v107, %v273
    %v275 = vpop.f32.mrf.mxu0
    %276 = vmatprep.mubr.bf16.mxu0 0
    %277 = vmatmul.mubr.bf16.gmra.mxu0 %v138
    %v278 = vpop.f32.mrf.mxu0
    %v279 = vadd.f32 %v107, %v278
    %v280 = vpop.f32.mrf.mxu0
    %v281 = vpop.f32.mrf.mxu0
    %v282 = vadd.f32 %v107, %v281
    %v283 = vpop.f32.mrf.mxu0
    %284 = vmatprep.mubr.bf16.mxu0 0
    %285 = vmatmul.mubr.bf16.gmra.mxu0 %v141
    %v286 = vpop.f32.mrf.mxu0
    %v287 = vadd.f32 %v107, %v286
    %v288 = vpop.f32.mrf.mxu0
    %v289 = vpop.f32.mrf.mxu0
    %v290 = vadd.f32 %v107, %v289
    %v291 = vpop.f32.mrf.mxu0
    %292 = vmatprep.mubr.bf16.mxu0 0
    %293 = vmatmul.mubr.bf16.gmra.mxu0 %v144
    %v294 = vpop.f32.mrf.mxu0
    %v295 = vadd.f32 %v107, %v294
    %v296 = vpop.f32.mrf.mxu0
    %v297 = vpop.f32.mrf.mxu0
    %v298 = vadd.f32 %v107, %v297
    %v299 = vpop.f32.mrf.mxu0
    %300 = vmatprep.mubr.bf16.mxu0 0
    %301 = vmatmul.mubr.bf16.gmra.mxu0 %v147
    %v302 = vpop.f32.mrf.mxu0
    %v303 = vadd.f32 %v107, %v302
    %v304 = vpop.f32.mrf.mxu0
    %v305 = vpop.f32.mrf.mxu0
    %v306 = vadd.f32 %v107, %v305
    %v307 = vpop.f32.mrf.mxu0
    %308 = vmatprep.mubr.bf16.mxu0 0
    %309 = vmatmul.mubr.bf16.gmra.mxu0 %v150
    %v310 = vpop.f32.mrf.mxu0
    %v311 = vadd.f32 %v107, %v310
    %v312 = vpop.f32.mrf.mxu0
    %v313 = vpop.f32.mrf.mxu0
    %v314 = vadd.f32 %v107, %v313
    %v315 = vpop.f32.mrf.mxu0
    %316 = vmatprep.mubr.bf16.mxu0 0
    %317 = vmatmul.mubr.bf16.gmra.mxu0 %v153
    %v318 = vpop.f32.mrf.mxu0
    %v319 = vadd.f32 %v107, %v318
    %v320 = vpop.f32.mrf.mxu0
    %v321 = vpop.f32.mrf.mxu0
    %v322 = vadd.f32 %v107, %v321
    %v323 = vpop.f32.mrf.mxu0
    %324 = vmatprep.mubr.bf16.mxu0 0
    %325 = vmatmul.mubr.bf16.gmra.mxu0 %v156
    %v326 = vpop.f32.mrf.mxu0
    %v327 = vadd.f32 %v107, %v326
    %v328 = vpop.f32.mrf.mxu0
    %v329 = vpop.f32.mrf.mxu0
    %v330 = vadd.f32 %v107, %v329
    %v331 = vpop.f32.mrf.mxu0
    %332 = vmatprep.mubr.bf16.mxu0 0
    %333 = vmatmul.mubr.bf16.gmra.mxu0 %v159
    %v334 = vpop.f32.mrf.mxu0
    %v335 = vadd.f32 %v107, %v334
    %v336 = vpop.f32.mrf.mxu0
    %v337 = vpop.f32.mrf.mxu0
    %v338 = vadd.f32 %v107, %v337
    %v339 = vpop.f32.mrf.mxu0
    %340 = vmatprep.mubr.bf16.mxu0 0
    %341 = vmatmul.mubr.bf16.gmra.mxu0 %v162
    %v342 = vpop.f32.mrf.mxu0
    %v343 = vadd.f32 %v107, %v342
    %v344 = vpop.f32.mrf.mxu0
    %v345 = vpop.f32.mrf.mxu0
    %v346 = vadd.f32 %v107, %v345
    %v347 = vpop.f32.mrf.mxu0
    %348 = vmatprep.mubr.bf16.mxu0 0
    %349 = vmatmul.mubr.bf16.gmra.mxu0 %v165
    %v350 = vpop.f32.mrf.mxu0
    %v351 = vadd.f32 %v107, %v350
    %v352 = vpop.f32.mrf.mxu0
    %v353 = vpop.f32.mrf.mxu0
    %v354 = vadd.f32 %v107, %v353
    %v355 = vpop.f32.mrf.mxu0
    %356 = vmatprep.mubr.bf16.mxu0 0
    %357 = vmatmul.mubr.bf16.gmra.mxu0 %v168
    %v358 = vpop.f32.mrf.mxu0
    %v359 = vadd.f32 %v107, %v358
    %v360 = vpop.f32.mrf.mxu0
    %v361 = vpop.f32.mrf.mxu0
    %v362 = vadd.f32 %v107, %v361
    %v363 = vpop.f32.mrf.mxu0
    %364 = vmatprep.mubr.bf16.mxu0 0
    %365 = vmatmul.mubr.bf16.gmra.mxu0 %v171
    %v366 = vpop.f32.mrf.mxu0
    %v367 = vadd.f32 %v107, %v366
    %v368 = vpop.f32.mrf.mxu0
    %v369 = vpop.f32.mrf.mxu0
    %v370 = vadd.f32 %v107, %v369
    %v371 = vpop.f32.mrf.mxu0
    %372 = vmatprep.mubr.bf16.mxu0 0
    %373 = vmatmul.mubr.bf16.gmra.mxu0 %v174
    %v374 = vpop.f32.mrf.mxu0
    %v375 = vadd.f32 %v107, %v374
    %v376 = vpop.f32.mrf.mxu0
    %v377 = vpop.f32.mrf.mxu0
    %v378 = vadd.f32 %v107, %v377
    %v379 = vpop.f32.mrf.mxu0
    %380 = vmatprep.mubr.bf16.mxu0 0
    %381 = vmatmul.mubr.bf16.gmra.mxu0 %v177
    %v382 = vpop.f32.mrf.mxu0
    %v383 = vadd.f32 %v107, %v382
    %v384 = vpop.f32.mrf.mxu0
    %v385 = vpop.f32.mrf.mxu0
    %v386 = vadd.f32 %v107, %v385
    %v387 = vpop.f32.mrf.mxu0
    %388 = vmatprep.mubr.bf16.mxu0 0
    %389 = vmatmul.mubr.bf16.gmra.mxu0 %v180
    %v390 = vpop.f32.mrf.mxu0
    %v391 = vadd.f32 %v107, %v390
    %v392 = vpop.f32.mrf.mxu0
    %v393 = vpop.f32.mrf.mxu0
    %v394 = vadd.f32 %v107, %v393
    %v395 = vpop.f32.mrf.mxu0
    %396 = vmatprep.mubr.bf16.mxu0 0
    %397 = vmatmul.mubr.bf16.gmra.mxu0 %v183
    %v398 = vpop.f32.mrf.mxu0
    %v399 = vadd.f32 %v107, %v398
    %v400 = vpop.f32.mrf.mxu0
    %v401 = vpop.f32.mrf.mxu0
    %v402 = vadd.f32 %v107, %v401
    %v403 = vpop.f32.mrf.mxu0
    %404 = vmatprep.mubr.bf16.mxu0 0
    %405 = vmatmul.mubr.bf16.gmra.mxu0 %v186
    %v406 = vpop.f32.mrf.mxu0
    %v407 = vadd.f32 %v107, %v406
    %v408 = vpop.f32.mrf.mxu0
    %v409 = vpop.f32.mrf.mxu0
    %v410 = vadd.f32 %v107, %v409
    %v411 = vpop.f32.mrf.mxu0
    %412 = vdwg.mxu0
    %v413 = vmax.f32 %v223, 0.0
    %v414 = vmax.f32 %v226, 0.0
    %v415 = vmax.f32 %v231, 0.0
    %v416 = vmax.f32 %v234, 0.0
    %v417 = vmax.f32 %v239, 0.0
    %v418 = vmax.f32 %v242, 0.0
    %v419 = vmax.f32 %v247, 0.0
    %v420 = vmax.f32 %v250, 0.0
    %v421 = vmax.f32 %v255, 0.0
    %v422 = vmax.f32 %v258, 0.0
    %v423 = vmax.f32 %v263, 0.0
    %v424 = vmax.f32 %v266, 0.0
    %v425 = vmax.f32 %v271, 0.0
    %v426 = vmax.f32 %v274, 0.0
    %v427 = vmax.f32 %v279, 0.0
    %v428 = vmax.f32 %v282, 0.0
    %v429 = vmax.f32 %v287, 0.0
    %v430 = vmax.f32 %v290, 0.0
    %v431 = vmax.f32 %v295, 0.0
    %v432 = vmax.f32 %v298, 0.0
    %v433 = vmax.f32 %v303, 0.0
    %v434 = vmax.f32 %v306, 0.0
    %v435 = vmax.f32 %v311, 0.0
    %v436 = vmax.f32 %v314, 0.0
    %v437 = vmax.f32 %v319, 0.0
    %v438 = vmax.f32 %v322, 0.0
    %v439 = vmax.f32 %v327, 0.0
    %v440 = vmax.f32 %v330, 0.0
    %v441 = vmax.f32 %v335, 0.0
    %v442 = vmax.f32 %v338, 0.0
    %v443 = vmax.f32 %v343, 0.0
    %v444 = vmax.f32 %v346, 0.0
    %v445 = vmax.f32 %v351, 0.0
    %v446 = vmax.f32 %v354, 0.0
    %v447 = vmax.f32 %v359, 0.0
    %v448 = vmax.f32 %v362, 0.0
    %v449 = vmax.f32 %v367, 0.0
    %v450 = vmax.f32 %v370, 0.0
    %v451 = vmax.f32 %v375, 0.0
    %v452 = vmax.f32 %v378, 0.0
    %v453 = vmax.f32 %v383, 0.0
    %v454 = vmax.f32 %v386, 0.0
    %v455 = vmax.f32 %v391, 0.0
    %v456 = vmax.f32 %v394, 0.0
    %v457 = vmax.f32 %v399, 0.0
    %v458 = vmax.f32 %v402, 0.0
    %v459 = vmax.f32 %v407, 0.0
    %v460 = vmax.f32 %v410, 0.0
    %v461 = vpack.c.bf16 %v414, %v413
    %v462 = vpack.c.bf16 %v416, %v415
    %v463 = vpack.c.bf16 %v418, %v417
    %v464 = vpack.c.bf16 %v420, %v419
    %v465 = vpack.c.bf16 %v422, %v421
    %v466 = vpack.c.bf16 %v424, %v423
    %v467 = vpack.c.bf16 %v426, %v425
    %v468 = vpack.c.bf16 %v428, %v427
    %v469 = vpack.c.bf16 %v430, %v429
    %v470 = vpack.c.bf16 %v432, %v431
    %v471 = vpack.c.bf16 %v434, %v433
    %v472 = vpack.c.bf16 %v436, %v435
    %v473 = vpack.c.bf16 %v438, %v437
    %v474 = vpack.c.bf16 %v440, %v439
    %v475 = vpack.c.bf16 %v442, %v441
    %v476 = vpack.c.bf16 %v444, %v443
    %v477 = vpack.c.bf16 %v446, %v445
    %v478 = vpack.c.bf16 %v448, %v447
    %v479 = vpack.c.bf16 %v450, %v449
    %v480 = vpack.c.bf16 %v452, %v451
    %v481 = vpack.c.bf16 %v454, %v453
    %v482 = vpack.c.bf16 %v456, %v455
    %v483 = vpack.c.bf16 %v458, %v457
    %v484 = vpack.c.bf16 %v460, %v459
    %v485 = vld [vmem:[%s3] sm:$0xf]
    %v486 = vld [vmem:[%s3 + $0x4] sm:$0xf]
    %v487 = vld [vmem:[%s3 + $0x8] sm:$0xf]
    %v488 = vld [vmem:[%s3 + $0xc] sm:$0xf]
    %v489 = vld [vmem:[%s4] sm:$0x1]
    %v491 = vlaneseq
    %v492 = vshrl.u32 %v491, 7
    %v493 = vsub.s32 0, %v492
    %v494 = vrot.slane %v489, %v493
    %v500 = vunpack.c.l.b16 %v485
    %v501 = vunpack.c.l.b16 %v486
    %v502 = vunpack.c.l.b16 %v487
    %v503 = vunpack.c.l.b16 %v488
    %v504 = vpack.c.b16 %v501, %v500
    %v505 = vpack.c.b16 %v503, %v502
    %vm508 = vcmask 261120
    %v510 = vsel %vm508, %v461, 0
    %v513 = vsel %vm508, %v462, 0
    %v516 = vsel %vm508, %v463, 0
    %v519 = vsel %vm508, %v464, 0
    %v522 = vsel %vm508, %v465, 0
    %v525 = vsel %vm508, %v466, 0
    %v528 = vsel %vm508, %v467, 0
    %v531 = vsel %vm508, %v468, 0
    %v534 = vsel %vm508, %v469, 0
    %v537 = vsel %vm508, %v470, 0
    %v540 = vsel %vm508, %v471, 0
    %v543 = vsel %vm508, %v472, 0
    %v546 = vsel %vm508, %v473, 0
    %v549 = vsel %vm508, %v474, 0
    %v552 = vsel %vm508, %v475, 0
    %v555 = vsel %vm508, %v476, 0
    %v558 = vsel %vm508, %v477, 0
    %v561 = vsel %vm508, %v478, 0
    %v564 = vsel %vm508, %v479, 0
    %v567 = vsel %vm508, %v480, 0
    %v570 = vsel %vm508, %v481, 0
    %v573 = vsel %vm508, %v482, 0
    %v576 = vsel %vm508, %v483, 0
    %v579 = vsel %vm508, %v484, 0
    %581 = vmatprep.subr.bf16.mxu0 0
    %582 = vmatpush1.bf16.msra.mxu0 0
    %583 = vmatprep.subr.bf16.mxu0 0
    %584 = vmatpush1.bf16.msra.mxu0 0
    %585 = vmatprep.subr.bf16.mxu0 0
    %586 = vmatpush1.bf16.msra.mxu0 0
    %587 = vmatprep.subr.bf16.mxu0 0
    %588 = vmatpush1.bf16.msra.mxu0 0
    %589 = vmatprep.subr.bf16.mxu0 0
    %590 = vmatpush1.bf16.msra.mxu0 0
    %591 = vmatprep.subr.bf16.mxu0 0
    %592 = vmatpush1.bf16.msra.mxu0 0
    %593 = vmatprep.subr.bf16.mxu0 0
    %594 = vmatpush1.bf16.msra.mxu0 %v505
    %595 = vmatprep.subr.bf16.mxu0 0
    %596 = vmatpush1.bf16.msra.mxu0 %v504
    %597 = vmatprep.subr.bf16.mxu0 0
    %598 = vmatpush2.bf16.msra.mxu0 0
    %599 = vmatprep.subr.bf16.mxu0 0
    %600 = vmatpush2.bf16.msra.mxu0 0
    %601 = vmatprep.subr.bf16.mxu0 0
    %602 = vmatpush2.bf16.msra.mxu0 0
    %603 = vmatprep.subr.bf16.mxu0 0
    %604 = vmatpush2.bf16.msra.mxu0 0
    %605 = vmatprep.subr.bf16.mxu0 0
    %606 = vmatpush2.bf16.msra.mxu0 0
    %607 = vmatprep.subr.bf16.mxu0 0
    %608 = vmatpush2.bf16.msra.mxu0 0
    %609 = vmatprep.subr.bf16.mxu0 0
    %610 = vmatpush2.bf16.msra.mxu0 0
    %611 = vmatprep.subr.bf16.mxu0 0
    %612 = vmatpush2.bf16.msra.mxu0 0
    %613 = vmatprep.mubr.bf16.mxu0 0
    %614 = vmatmul.mubr.bf16.gmra.mxu0 %v510
    %v615 = vpop.f32.mrf.mxu0
    %v616 = vadd.f32 %v494, %v615
    %v617 = vpop.f32.mrf.mxu0
    %v618 = vpop.f32.mrf.mxu0
    %v619 = vadd.f32 %v494, %v618
    %v620 = vpop.f32.mrf.mxu0
    %621 = vmatprep.mubr.bf16.mxu0 0
    %622 = vmatmul.mubr.bf16.gmra.mxu0 %v513
    %v623 = vpop.f32.mrf.mxu0
    %v624 = vadd.f32 %v494, %v623
    %v625 = vpop.f32.mrf.mxu0
    %v626 = vpop.f32.mrf.mxu0
    %v627 = vadd.f32 %v494, %v626
    %v628 = vpop.f32.mrf.mxu0
    %629 = vmatprep.mubr.bf16.mxu0 0
    %630 = vmatmul.mubr.bf16.gmra.mxu0 %v516
    %v631 = vpop.f32.mrf.mxu0
    %v632 = vadd.f32 %v494, %v631
    %v633 = vpop.f32.mrf.mxu0
    %v634 = vpop.f32.mrf.mxu0
    %v635 = vadd.f32 %v494, %v634
    %v636 = vpop.f32.mrf.mxu0
    %637 = vmatprep.mubr.bf16.mxu0 0
    %638 = vmatmul.mubr.bf16.gmra.mxu0 %v519
    %v639 = vpop.f32.mrf.mxu0
    %v640 = vadd.f32 %v494, %v639
    %v641 = vpop.f32.mrf.mxu0
    %v642 = vpop.f32.mrf.mxu0
    %v643 = vadd.f32 %v494, %v642
    %v644 = vpop.f32.mrf.mxu0
    %645 = vmatprep.mubr.bf16.mxu0 0
    %646 = vmatmul.mubr.bf16.gmra.mxu0 %v522
    %v647 = vpop.f32.mrf.mxu0
    %v648 = vadd.f32 %v494, %v647
    %v649 = vpop.f32.mrf.mxu0
    %v650 = vpop.f32.mrf.mxu0
    %v651 = vadd.f32 %v494, %v650
    %v652 = vpop.f32.mrf.mxu0
    %653 = vmatprep.mubr.bf16.mxu0 0
    %654 = vmatmul.mubr.bf16.gmra.mxu0 %v525
    %v655 = vpop.f32.mrf.mxu0
    %v656 = vadd.f32 %v494, %v655
    %v657 = vpop.f32.mrf.mxu0
    %v658 = vpop.f32.mrf.mxu0
    %v659 = vadd.f32 %v494, %v658
    %v660 = vpop.f32.mrf.mxu0
    %661 = vmatprep.mubr.bf16.mxu0 0
    %662 = vmatmul.mubr.bf16.gmra.mxu0 %v528
    %v663 = vpop.f32.mrf.mxu0
    %v664 = vadd.f32 %v494, %v663
    %v665 = vpop.f32.mrf.mxu0
    %v666 = vpop.f32.mrf.mxu0
    %v667 = vadd.f32 %v494, %v666
    %v668 = vpop.f32.mrf.mxu0
    %669 = vmatprep.mubr.bf16.mxu0 0
    %670 = vmatmul.mubr.bf16.gmra.mxu0 %v531
    %v671 = vpop.f32.mrf.mxu0
    %v672 = vadd.f32 %v494, %v671
    %v673 = vpop.f32.mrf.mxu0
    %v674 = vpop.f32.mrf.mxu0
    %v675 = vadd.f32 %v494, %v674
    %v676 = vpop.f32.mrf.mxu0
    %677 = vmatprep.mubr.bf16.mxu0 0
    %678 = vmatmul.mubr.bf16.gmra.mxu0 %v534
    %v679 = vpop.f32.mrf.mxu0
    %v680 = vadd.f32 %v494, %v679
    %v681 = vpop.f32.mrf.mxu0
    %v682 = vpop.f32.mrf.mxu0
    %v683 = vadd.f32 %v494, %v682
    %v684 = vpop.f32.mrf.mxu0
    %685 = vmatprep.mubr.bf16.mxu0 0
    %686 = vmatmul.mubr.bf16.gmra.mxu0 %v537
    %v687 = vpop.f32.mrf.mxu0
    %v688 = vadd.f32 %v494, %v687
    %v689 = vpop.f32.mrf.mxu0
    %v690 = vpop.f32.mrf.mxu0
    %v691 = vadd.f32 %v494, %v690
    %v692 = vpop.f32.mrf.mxu0
    %693 = vmatprep.mubr.bf16.mxu0 0
    %694 = vmatmul.mubr.bf16.gmra.mxu0 %v540
    %v695 = vpop.f32.mrf.mxu0
    %v696 = vadd.f32 %v494, %v695
    %v697 = vpop.f32.mrf.mxu0
    %v698 = vpop.f32.mrf.mxu0
    %v699 = vadd.f32 %v494, %v698
    %v700 = vpop.f32.mrf.mxu0
    %701 = vmatprep.mubr.bf16.mxu0 0
    %702 = vmatmul.mubr.bf16.gmra.mxu0 %v543
    %v703 = vpop.f32.mrf.mxu0
    %v704 = vadd.f32 %v494, %v703
    %v705 = vpop.f32.mrf.mxu0
    %v706 = vpop.f32.mrf.mxu0
    %v707 = vadd.f32 %v494, %v706
    %v708 = vpop.f32.mrf.mxu0
    %709 = vmatprep.mubr.bf16.mxu0 0
    %710 = vmatmul.mubr.bf16.gmra.mxu0 %v546
    %v711 = vpop.f32.mrf.mxu0
    %v712 = vadd.f32 %v494, %v711
    %v713 = vpop.f32.mrf.mxu0
    %v714 = vpop.f32.mrf.mxu0
    %v715 = vadd.f32 %v494, %v714
    %v716 = vpop.f32.mrf.mxu0
    %717 = vmatprep.mubr.bf16.mxu0 0
    %718 = vmatmul.mubr.bf16.gmra.mxu0 %v549
    %v719 = vpop.f32.mrf.mxu0
    %v720 = vadd.f32 %v494, %v719
    %v721 = vpop.f32.mrf.mxu0
    %v722 = vpop.f32.mrf.mxu0
    %v723 = vadd.f32 %v494, %v722
    %v724 = vpop.f32.mrf.mxu0
    %725 = vmatprep.mubr.bf16.mxu0 0
    %726 = vmatmul.mubr.bf16.gmra.mxu0 %v552
    %v727 = vpop.f32.mrf.mxu0
    %v728 = vadd.f32 %v494, %v727
    %v729 = vpop.f32.mrf.mxu0
    %v730 = vpop.f32.mrf.mxu0
    %v731 = vadd.f32 %v494, %v730
    %v732 = vpop.f32.mrf.mxu0
    %733 = vmatprep.mubr.bf16.mxu0 0
    %734 = vmatmul.mubr.bf16.gmra.mxu0 %v555
    %v735 = vpop.f32.mrf.mxu0
    %v736 = vadd.f32 %v494, %v735
    %v737 = vpop.f32.mrf.mxu0
    %v738 = vpop.f32.mrf.mxu0
    %v739 = vadd.f32 %v494, %v738
    %v740 = vpop.f32.mrf.mxu0
    %741 = vmatprep.mubr.bf16.mxu0 0
    %742 = vmatmul.mubr.bf16.gmra.mxu0 %v558
    %v743 = vpop.f32.mrf.mxu0
    %v744 = vadd.f32 %v494, %v743
    %v745 = vpop.f32.mrf.mxu0
    %v746 = vpop.f32.mrf.mxu0
    %v747 = vadd.f32 %v494, %v746
    %v748 = vpop.f32.mrf.mxu0
    %749 = vmatprep.mubr.bf16.mxu0 0
    %750 = vmatmul.mubr.bf16.gmra.mxu0 %v561
    %v751 = vpop.f32.mrf.mxu0
    %v752 = vadd.f32 %v494, %v751
    %v753 = vpop.f32.mrf.mxu0
    %v754 = vpop.f32.mrf.mxu0
    %v755 = vadd.f32 %v494, %v754
    %v756 = vpop.f32.mrf.mxu0
    %757 = vmatprep.mubr.bf16.mxu0 0
    %758 = vmatmul.mubr.bf16.gmra.mxu0 %v564
    %v759 = vpop.f32.mrf.mxu0
    %v760 = vadd.f32 %v494, %v759
    %v761 = vpop.f32.mrf.mxu0
    %v762 = vpop.f32.mrf.mxu0
    %v763 = vadd.f32 %v494, %v762
    %v764 = vpop.f32.mrf.mxu0
    %765 = vmatprep.mubr.bf16.mxu0 0
    %766 = vmatmul.mubr.bf16.gmra.mxu0 %v567
    %v767 = vpop.f32.mrf.mxu0
    %v768 = vadd.f32 %v494, %v767
    %v769 = vpop.f32.mrf.mxu0
    %v770 = vpop.f32.mrf.mxu0
    %v771 = vadd.f32 %v494, %v770
    %v772 = vpop.f32.mrf.mxu0
    %773 = vmatprep.mubr.bf16.mxu0 0
    %774 = vmatmul.mubr.bf16.gmra.mxu0 %v570
    %v775 = vpop.f32.mrf.mxu0
    %v776 = vadd.f32 %v494, %v775
    %v777 = vpop.f32.mrf.mxu0
    %v778 = vpop.f32.mrf.mxu0
    %v779 = vadd.f32 %v494, %v778
    %v780 = vpop.f32.mrf.mxu0
    %781 = vmatprep.mubr.bf16.mxu0 0
    %782 = vmatmul.mubr.bf16.gmra.mxu0 %v573
    %v783 = vpop.f32.mrf.mxu0
    %v784 = vadd.f32 %v494, %v783
    %v785 = vpop.f32.mrf.mxu0
    %v786 = vpop.f32.mrf.mxu0
    %v787 = vadd.f32 %v494, %v786
    %v788 = vpop.f32.mrf.mxu0
    %789 = vmatprep.mubr.bf16.mxu0 0
    %790 = vmatmul.mubr.bf16.gmra.mxu0 %v576
    %v791 = vpop.f32.mrf.mxu0
    %v792 = vadd.f32 %v494, %v791
    %v793 = vpop.f32.mrf.mxu0
    %v794 = vpop.f32.mrf.mxu0
    %v795 = vadd.f32 %v494, %v794
    %v796 = vpop.f32.mrf.mxu0
    %797 = vmatprep.mubr.bf16.mxu0 0
    %798 = vmatmul.mubr.bf16.gmra.mxu0 %v579
    %v799 = vpop.f32.mrf.mxu0
    %v800 = vadd.f32 %v494, %v799
    %v801 = vpop.f32.mrf.mxu0
    %v802 = vpop.f32.mrf.mxu0
    %v803 = vadd.f32 %v494, %v802
    %v804 = vpop.f32.mrf.mxu0
    %805 = vdwg.mxu0
    %v806 = vmax.f32 %v616, 0.0
    %v807 = vmax.f32 %v619, 0.0
    %v808 = vmax.f32 %v624, 0.0
    %v809 = vmax.f32 %v627, 0.0
    %v810 = vmax.f32 %v632, 0.0
    %v811 = vmax.f32 %v635, 0.0
    %v812 = vmax.f32 %v640, 0.0
    %v813 = vmax.f32 %v643, 0.0
    %v814 = vmax.f32 %v648, 0.0
    %v815 = vmax.f32 %v651, 0.0
    %v816 = vmax.f32 %v656, 0.0
    %v817 = vmax.f32 %v659, 0.0
    %v818 = vmax.f32 %v664, 0.0
    %v819 = vmax.f32 %v667, 0.0
    %v820 = vmax.f32 %v672, 0.0
    %v821 = vmax.f32 %v675, 0.0
    %v822 = vmax.f32 %v680, 0.0
    %v823 = vmax.f32 %v683, 0.0
    %v824 = vmax.f32 %v688, 0.0
    %v825 = vmax.f32 %v691, 0.0
    %v826 = vmax.f32 %v696, 0.0
    %v827 = vmax.f32 %v699, 0.0
    %v828 = vmax.f32 %v704, 0.0
    %v829 = vmax.f32 %v707, 0.0
    %v830 = vmax.f32 %v712, 0.0
    %v831 = vmax.f32 %v715, 0.0
    %v832 = vmax.f32 %v720, 0.0
    %v833 = vmax.f32 %v723, 0.0
    %v834 = vmax.f32 %v728, 0.0
    %v835 = vmax.f32 %v731, 0.0
    %v836 = vmax.f32 %v736, 0.0
    %v837 = vmax.f32 %v739, 0.0
    %v838 = vmax.f32 %v744, 0.0
    %v839 = vmax.f32 %v747, 0.0
    %v840 = vmax.f32 %v752, 0.0
    %v841 = vmax.f32 %v755, 0.0
    %v842 = vmax.f32 %v760, 0.0
    %v843 = vmax.f32 %v763, 0.0
    %v844 = vmax.f32 %v768, 0.0
    %v845 = vmax.f32 %v771, 0.0
    %v846 = vmax.f32 %v776, 0.0
    %v847 = vmax.f32 %v779, 0.0
    %v848 = vmax.f32 %v784, 0.0
    %v849 = vmax.f32 %v787, 0.0
    %v850 = vmax.f32 %v792, 0.0
    %v851 = vmax.f32 %v795, 0.0
    %v852 = vmax.f32 %v800, 0.0
    %v853 = vmax.f32 %v803, 0.0
    %v854 = vpack.c.bf16 %v807, %v806
    %v855 = vpack.c.bf16 %v809, %v808
    %v856 = vpack.c.bf16 %v811, %v810
    %v857 = vpack.c.bf16 %v813, %v812
    %v858 = vpack.c.bf16 %v815, %v814
    %v859 = vpack.c.bf16 %v817, %v816
    %v860 = vpack.c.bf16 %v819, %v818
    %v861 = vpack.c.bf16 %v821, %v820
    %v862 = vpack.c.bf16 %v823, %v822
    %v863 = vpack.c.bf16 %v825, %v824
    %v864 = vpack.c.bf16 %v827, %v826
    %v865 = vpack.c.bf16 %v829, %v828
    %v866 = vpack.c.bf16 %v831, %v830
    %v867 = vpack.c.bf16 %v833, %v832
    %v868 = vpack.c.bf16 %v835, %v834
    %v869 = vpack.c.bf16 %v837, %v836
    %v870 = vpack.c.bf16 %v839, %v838
    %v871 = vpack.c.bf16 %v841, %v840
    %v872 = vpack.c.bf16 %v843, %v842
    %v873 = vpack.c.bf16 %v845, %v844
    %v874 = vpack.c.bf16 %v847, %v846
    %v875 = vpack.c.bf16 %v849, %v848
    %v876 = vpack.c.bf16 %v851, %v850
    %v877 = vpack.c.bf16 %v853, %v852
    %v878 = vld [vmem:[%s5] sm:$0xf]
    %v879 = vld [vmem:[%s6] sm:$0xff]
    %881 = vset.pattern.permute.xlu0 0
    %882 = vperm.xlu0 %881, %v879
    %v883 = vpop.permute.xlu0 %882
    %v886 = vsel %vm508, %v878, 0
    %v889 = vsel %vm508, %v854, 0
    %v892 = vsel %vm508, %v855, 0
    %v895 = vsel %vm508, %v856, 0
    %v898 = vsel %vm508, %v857, 0
    %v901 = vsel %vm508, %v858, 0
    %v904 = vsel %vm508, %v859, 0
    %v907 = vsel %vm508, %v860, 0
    %v910 = vsel %vm508, %v861, 0
    %v913 = vsel %vm508, %v862, 0
    %v916 = vsel %vm508, %v863, 0
    %v919 = vsel %vm508, %v864, 0
    %v922 = vsel %vm508, %v865, 0
    %v925 = vsel %vm508, %v866, 0
    %v928 = vsel %vm508, %v867, 0
    %v931 = vsel %vm508, %v868, 0
    %v934 = vsel %vm508, %v869, 0
    %v937 = vsel %vm508, %v870, 0
    %v940 = vsel %vm508, %v871, 0
    %v943 = vsel %vm508, %v872, 0
    %v946 = vsel %vm508, %v873, 0
    %v949 = vsel %vm508, %v874, 0
    %v952 = vsel %vm508, %v875, 0
    %v955 = vsel %vm508, %v876, 0
    %v958 = vsel %vm508, %v877, 0
    %960 = vmatprep.subr.bf16.mxu0 0
    %961 = vmatpush1.bf16.xpose.msra.mxu0 %v910
    %962 = vmatprep.subr.bf16.mxu0 0
    %963 = vmatpush1.bf16.xpose.msra.mxu0 %v907
    %964 = vmatprep.subr.bf16.mxu0 0
    %965 = vmatpush1.bf16.xpose.msra.mxu0 %v904
    %966 = vmatprep.subr.bf16.mxu0 0
    %967 = vmatpush1.bf16.xpose.msra.mxu0 %v901
    %968 = vmatprep.subr.bf16.mxu0 0
    %969 = vmatpush1.bf16.xpose.msra.mxu0 %v898
    %970 = vmatprep.subr.bf16.mxu0 0
    %971 = vmatpush1.bf16.xpose.msra.mxu0 %v895
    %972 = vmatprep.subr.bf16.mxu0 0
    %973 = vmatpush1.bf16.xpose.msra.mxu0 %v892
    %974 = vmatprep.subr.bf16.mxu0 0
    %975 = vmatpush1.bf16.xpose.msra.mxu0 %v889
    %976 = vmatprep.subr.bf16.mxu0 0
    %977 = vmatpush2.bf16.xpose.msra.mxu0 %v934
    %978 = vmatprep.subr.bf16.mxu0 0
    %979 = vmatpush2.bf16.xpose.msra.mxu0 %v931
    %980 = vmatprep.subr.bf16.mxu0 0
    %981 = vmatpush2.bf16.xpose.msra.mxu0 %v928
    %982 = vmatprep.subr.bf16.mxu0 0
    %983 = vmatpush2.bf16.xpose.msra.mxu0 %v925
    %984 = vmatprep.subr.bf16.mxu0 0
    %985 = vmatpush2.bf16.xpose.msra.mxu0 %v922
    %986 = vmatprep.subr.bf16.mxu0 0
    %987 = vmatpush2.bf16.xpose.msra.mxu0 %v919
    %988 = vmatprep.subr.bf16.mxu0 0
    %989 = vmatpush2.bf16.xpose.msra.mxu0 %v916
    %990 = vmatprep.subr.bf16.mxu0 0
    %991 = vmatpush2.bf16.xpose.msra.mxu0 %v913
    %992 = vmatprep.mubr.bf16.mxu0 0
    %993 = vmatmul.mubr.bf16.gmra.mxu0 %v886
    %v994 = vpop.f32.mrf.mxu0
    %v995 = vadd.f32 %v883, %v994
    %v996 = vpop.f32.mrf.mxu0
    %v997 = vadd.f32 %v883, %v996
    %v998 = vpop.f32.mrf.mxu0
    %v999 = vpop.f32.mrf.mxu0
    %1000 = vdwg.mxu0
    %1001 = vmatprep.subr.bf16.mxu0 0
    %1002 = vmatpush1.bf16.xpose.msra.mxu0 %v958
    %1003 = vmatprep.subr.bf16.mxu0 0
    %1004 = vmatpush1.bf16.xpose.msra.mxu0 %v955
    %1005 = vmatprep.subr.bf16.mxu0 0
    %1006 = vmatpush1.bf16.xpose.msra.mxu0 %v952
    %1007 = vmatprep.subr.bf16.mxu0 0
    %1008 = vmatpush1.bf16.xpose.msra.mxu0 %v949
    %1009 = vmatprep.subr.bf16.mxu0 0
    %1010 = vmatpush1.bf16.xpose.msra.mxu0 %v946
    %1011 = vmatprep.subr.bf16.mxu0 0
    %1012 = vmatpush1.bf16.xpose.msra.mxu0 %v943
    %1013 = vmatprep.subr.bf16.mxu0 0
    %1014 = vmatpush1.bf16.xpose.msra.mxu0 %v940
    %1015 = vmatprep.subr.bf16.mxu0 0
    %1016 = vmatpush1.bf16.xpose.msra.mxu0 %v937
    %1017 = vmatprep.subr.bf16.mxu0 0
    %1018 = vmatpush2.bf16.xpose.msra.mxu0 0
    %1019 = vmatprep.subr.bf16.mxu0 0
    %1020 = vmatpush2.bf16.xpose.msra.mxu0 0
    %1021 = vmatprep.subr.bf16.mxu0 0
    %1022 = vmatpush2.bf16.xpose.msra.mxu0 0
    %1023 = vmatprep.subr.bf16.mxu0 0
    %1024 = vmatpush2.bf16.xpose.msra.mxu0 0
    %1025 = vmatprep.subr.bf16.mxu0 0
    %1026 = vmatpush2.bf16.xpose.msra.mxu0 0
    %1027 = vmatprep.subr.bf16.mxu0 0
    %1028 = vmatpush2.bf16.xpose.msra.mxu0 0
    %1029 = vmatprep.subr.bf16.mxu0 0
    %1030 = vmatpush2.bf16.xpose.msra.mxu0 0
    %1031 = vmatprep.subr.bf16.mxu0 0
    %1032 = vmatpush2.bf16.xpose.msra.mxu0 0
    %1033 = vmatprep.mubr.bf16.mxu0 0
    %1034 = vmatmul.mubr.bf16.gmra.mxu0 %v886
    %v1035 = vpop.f32.mrf.mxu0
    %v1036 = vadd.f32 %v883, %v1035
    %v1037 = vpop.f32.mrf.mxu0
    %v1038 = vpop.f32.mrf.mxu0
    %v1039 = vpop.f32.mrf.mxu0
    %1040 = vdwg.mxu0
    %1041 = vst [vmem:[#allocation2] sm:$0xff] %v995
    %1042 = vst [vmem:[#allocation2 + $0x8] sm:$0xff] %v997
    %1043 = vst [vmem:[#allocation2 + $0x10] sm:$0xff] %v1036
    // Predicated region
    $region30: #{tpu_custom_call.1} parent=1 // pred_check
      _
    $region31: #{tpu_custom_call.1} parent=1 // pred_check_branch
      %1045 = sbr.rel (0) target = $region33
    $region32: #{tpu_custom_call.1} parent=1 // pred_region
      %s1047 = ssub.s32 384, 384
      %1048 = vsyncadd [#allocation3], %s1047
      %s1050 = sshll.u32 [#allocation2], 4
      %s1051 = int_to_ptr.vmem [resolvable:$true] %s1050
      %1053 = dma.vmem_to_hbm [thread:$0]  %s1051, 384, %s7, [#allocation3]
    $region33: #{tpu_custom_call.1} parent=1 // pred_fallthru
      _
    // Predicated region
    $region34: #{tpu_custom_call.1} parent=1 // pred_check
      _
    $region35: #{tpu_custom_call.1} parent=1 // pred_check_branch
      %1055 = sbr.rel (0) target = $region37
    $region36: #{tpu_custom_call.1} parent=1 // pred_region
      %1056 = dma.done [#allocation3], 384
    $region37: #{tpu_custom_call.1} parent=1 // pred_fallthru
      _
    %1057 = vsyncpa [#allocation3], 1

</llo_original>
